<compile_context>
chip_gen: v5e
topology: v5e:2x2
jax: 0.10.0
libtpu: 0.0.40
codegen_flags: <defaults>
</compile_context>

<pallas_src>
import jax
import jax.numpy as jnp
from jax import lax
from jax.experimental import pallas as pl
from jax.experimental.pallas import tpu as pltpu


def linear_kernel(x_ref, p_ref, o_ref):
    # x_ref: [B, IN]      f32
    # p_ref: [IN+1, OUT]  f32  (rows 0..IN-1 = weight.T in [IN, OUT] layout; row IN = bias)
    # o_ref: [B, OUT]
    in_dim = x_ref.shape[1]
    x = x_ref[...]
    w = p_ref[:in_dim, :]        # [IN, OUT] — static slice of the resident VMEM block
    b = p_ref[in_dim:, :]        # [1, OUT]  — broadcasts over the batch sublanes
    acc = lax.dot_general(
        x, w,
        dimension_numbers=(((1,), (0,)), ((), ())),   # contract lane dim of x with sublane dim of w
        preferred_element_type=jnp.float32,
    )
    o_ref[...] = (acc + b).astype(o_ref.dtype)


def pack_params(weight, bias):
    """One-time parameter packing (done at init, not per call).

    weight: [OUT, IN] f32 (PyTorch nn.Linear layout)
    bias:   [OUT]     f32
    returns [IN+1, OUT] f32: weight.T stacked on top of bias.
    """
    return jnp.concatenate([weight.T, bias[None, :]], axis=0)


def simple_model_forward(x, params):
    """Forward of SimpleModel: y = x @ weight.T + bias.

    x:      [B, 10]   f32
    params: [11, 5]   f32 (packed weight.T + bias, from pack_params)
    """
    B, IN = x.shape
    OUT = params.shape[1]

    return pl.pallas_call(
        linear_kernel,
        out_shape=jax.ShapeDtypeStruct((B, OUT), x.dtype),
        in_specs=[
            pl.BlockSpec(memory_space=pltpu.VMEM),   # x      — whole array, one DMA
            pl.BlockSpec(memory_space=pltpu.VMEM),   # params — whole array, one DMA
        ],
        out_specs=pl.BlockSpec(memory_space=pltpu.VMEM),
        cost_estimate=pl.CostEstimate(
            flops=2 * B * IN * OUT,
            transcendentals=0,
            bytes_accessed=(x.size + params.size + B * OUT) * 4,
        ),
    )(x, params)


if __name__ == "__main__":
    key = jax.random.PRNGKey(0)
    kx, kw, kb = jax.random.split(key, 3)

    B, IN, OUT = 2, 10, 5

    # Deterministic synthetic parameters (same shapes as nn.Linear(10, 5)).
    x = jax.random.normal(kx, (B, IN), dtype=jnp.float32)
    weight = jax.random.normal(kw, (OUT, IN), dtype=jnp.float32) * 0.1  # torch layout [out, in]
    bias = jax.random.normal(kb, (OUT,), dtype=jnp.float32) * 0.1

    params = pack_params(weight, bias)   # one-time init-side packing

    out = jax.block_until_ready(simple_model_forward(x, params))

    # Correctness check against plain JAX reference of the torch semantics.
    ref = x @ weight.T + bias
    assert out.shape == (B, OUT)
    assert jnp.allclose(out, ref, atol=1e-5, rtol=1e-5)

    print("KERNEL_OK")
</pallas_src>

<mosaic_0001>
module attributes {stable_mosaic.version = 11 : i64} {
  func.func @linear_kernel(%arg0: memref<2x10xf32, #tpu.memory_space<vmem>>, %arg1: memref<11x5xf32, #tpu.memory_space<vmem>>, %arg2: memref<2x5xf32, #tpu.memory_space<vmem>>) attributes {dimension_semantics = [], scalar_prefetch = 0 : i64, scratch_operands = 0 : i64, tpu.core_type = #tpu.core_type<tc>} {
    %c0 = arith.constant 0 : index
    %c0_0 = arith.constant 0 : index
    %0 = vector.load %arg0[%c0, %c0_0] : memref<2x10xf32, #tpu.memory_space<vmem>>, vector<2x10xf32>
    %c0_1 = arith.constant 0 : index
    %c0_2 = arith.constant 0 : index
    %1 = vector.load %arg1[%c0_1, %c0_2] : memref<11x5xf32, #tpu.memory_space<vmem>>, vector<10x5xf32>
    %c10 = arith.constant 10 : index
    %c0_3 = arith.constant 0 : index
    %2 = vector.load %arg1[%c10, %c0_3] : memref<11x5xf32, #tpu.memory_space<vmem>>, vector<1x5xf32>
    %cst = arith.constant dense<0.000000e+00> : vector<2x5xf32>
    %3 = tpu.matmul %0, %1, %cst {dimension_numbers = #tpu.dot_dimension_numbers<[1], [0], [0], [1], [0, 0, 1, 1], [], []>} : vector<2x10xf32>, vector<10x5xf32>, vector<2x5xf32> -> vector<2x5xf32>
    %4 = vector.broadcast %2 : vector<1x5xf32> to vector<2x5xf32>
    %5 = arith.addf %3, %4 : vector<2x5xf32>
    %c0_4 = arith.constant 0 : index
    %c0_5 = arith.constant 0 : index
    %6 = vector.load %arg2[%c0_4, %c0_5] : memref<2x5xf32, #tpu.memory_space<vmem>>, vector<2x5xf32>
    tpu.vector_store %arg2[%c0_4, %c0_5], %5 {strides = array<i32>} : memref<2x5xf32, #tpu.memory_space<vmem>>, vector<2x5xf32>,
    return
  }
}

</mosaic_0001>

<llo_original>
// kernel: tpu_custom_call.1
$region0: #{tpu_custom_call.1}
  #allocation0 [shape = 'u32[]', space=smem, size = 0x4, offset = 0x4, fixed_abs, tag = 'smem constant byte address 0x4 - core index']
  #allocation1 [shape = 'u32[72,128]{1,0:T(1,128)}', space=vmem, size = 0x9000, scoped, tag = 'internal scratch']
  %s0 = inlined_call_operand.vmem [shape: f32[2,10], index: 0, kind: input, shape index: {}]
  %s1 = inlined_call_operand.vmem [shape: f32[11,5], index: 1, kind: input, shape index: {}]
  %s2 = inlined_call_operand.hbm [shape: f32[2,5], index: 2, kind: output, shape index: {}]
  %s3 = sld [smem:[#allocation0]]
  $region18: #{tpu_custom_call.1} parent=0
    _
  %s5 = ssub.s32 1, %s3
  %s6 = scalar_select 0, %s5, %s3
  $region1: #{tpu_custom_call.1} parent=0
    #allocation2 [shape = 'u8[1024]{0}', space=vmem, size = 0x400, scoped, tag = 'output window, operand 0, single buffered']
    #allocation3 [shape = 's32[1]{0}', space=sflag, size = 0x4, scoped, tag = 'scoped memory for tpu_custom_call.1']
    %7 = vsyncpa [#allocation3], 0
    // Predicated region
    $region2: #{tpu_custom_call.1} parent=1 // pred_check
      _
    $region3: #{tpu_custom_call.1} parent=1 // pred_check_branch
      %9 = sbr.rel (0) target = $region5
    $region4: #{tpu_custom_call.1} parent=1 // pred_region
      _
    $region5: #{tpu_custom_call.1} parent=1 // pred_fallthru
      _
    // Predicated region
    $region6: #{tpu_custom_call.1} parent=1 // pred_check
      _
    $region7: #{tpu_custom_call.1} parent=1 // pred_check_branch
      %11 = sbr.rel (0) target = $region9
    $region8: #{tpu_custom_call.1} parent=1 // pred_region
      _
    $region9: #{tpu_custom_call.1} parent=1 // pred_fallthru
      _
    %v12 = vld [vmem:[%s0] sm:$0x3]
    %v13 = vld [vmem:[%s1] sm:$0xff]
    %v14 = vld [vmem:[%s1 + $0x8] sm:$0x3]
    %v15 = vld [vmem:[%s1 + $0xa] sm:$0x1]
    %v16 = vperm.slane %v15, 0
    %vm17 = vcmask 80896
    %v19 = vsel %vm17, %v12, 0
    %vm21 = vcmask 1041408
    %v23 = vsel %vm21, %v14, 0
    %25 = vmatpush.msra.mxu0 0.0
    %26 = vmatpush.msra.mxu0 0.0
    %27 = vmatpush.msra.mxu0 0.0
    %28 = vmatpush.msra.mxu0 0.0
    %29 = vmatpush.msra.mxu0 0.0
    %30 = vmatpush.msra.mxu0 0.0
    %31 = vmatpush.msra.mxu0 0.0
    %32 = vmatpush.msra.mxu0 0.0
    %33 = vmatpush.msra.mxu0 0.0
    %34 = vmatpush.msra.mxu0 0.0
    %35 = vmatpush.msra.mxu0 0.0
    %36 = vmatpush.msra.mxu0 0.0
    %37 = vmatpush.msra.mxu0 0.0
    %38 = vmatpush.msra.mxu0 0.0
    %39 = vmatpush.msra.mxu0 %v23
    %40 = vmatpush.msra.mxu0 %v13
    %41 = vmatmul.f32.gmra.mxu0 %v19
    %v42 = vpop.f32.mrf.mxu0
    %v43 = vadd.f32 %v16, %v42
    %44 = vdwg.mxu0
    %vm45 = vcmask 33792
    %46 = vst.msk [vmem:[#allocation2] sm:$0x3] %vm45, %v43
    // Predicated region
    $region10: #{tpu_custom_call.1} parent=1 // pred_check
      _
    $region11: #{tpu_custom_call.1} parent=1 // pred_check_branch
      %48 = sbr.rel (0) target = $region13
    $region12: #{tpu_custom_call.1} parent=1 // pred_region
      %50 = vsyncadd [#allocation3], 0
      %s52 = sshll.u32 [#allocation2], 4
      %s53 = int_to_ptr.vmem [resolvable:$true] %s52
      %s54 = sshll.u32 %s2, 4
      %s55 = int_to_ptr.hbm [resolvable:$true] %s54
      %57 = dma.vmem_to_hbm [thread:$0]  %s53, 32, %s55, [#allocation3]
    $region13: #{tpu_custom_call.1} parent=1 // pred_fallthru
      _
    // Predicated region
    $region14: #{tpu_custom_call.1} parent=1 // pred_check
      _
    $region15: #{tpu_custom_call.1} parent=1 // pred_check_branch
      %59 = sbr.rel (0) target = $region17
    $region16: #{tpu_custom_call.1} parent=1 // pred_region
      %61 = dma.done [#allocation3], 32
    $region17: #{tpu_custom_call.1} parent=1 // pred_fallthru
      _
    %62 = vsyncpa [#allocation3], 1

</llo_original>
